<compile_context>
chip_gen: v7x
topology: tpu7x:2x2x1
jax: 0.10.0
libtpu: 0.0.40
codegen_flags: <defaults>
</compile_context>

<pallas_src>
import functools

import jax
import jax.numpy as jnp
from jax.experimental import pallas as pl
from jax.experimental.pallas import tpu as pltpu

_LANE = 128
_SUBLANE = 8


def _round_up(n, m):
    return ((n + m - 1) // m) * m


# ----------------------------------------------------------------------------- kernel
def _actor_critic_fused_kernel(x_ref, w1_ref, b1_ref, w2_ref, b2_ref,
                               wh_ref, bh_ref, out_ref):
    """One batch tile of the fused ActorCritic forward.

    x_ref  : [TB, obs_dim]   activations (compute dtype)
    w1_ref : [obs_dim, 2H]   fused [actor_w1 | critic_w1]
    w2_ref : [2H, 2H]        block-diag(actor_w2, critic_w2)
    wh_ref : [2H, OUTW]      fused heads: [mean | log_std | value | zero pad]
    b*_ref : [1, width]      f32 biases (added to the f32 accumulator)
    out_ref: [TB, OUTW]      f32 lane-dense output slab
    """
    cdt = w1_ref.dtype
    x = x_ref[...]

    # layer 1 (both trunks at once): [TB, 2H] = [ha1 | hc1]
    h = jnp.tanh(
        jnp.dot(x, w1_ref[...], preferred_element_type=jnp.float32) + b1_ref[...]
    ).astype(cdt)

    # layer 2 (block-diagonal keeps trunks independent): [TB, 2H] = [ha | hc]
    h = jnp.tanh(
        jnp.dot(h, w2_ref[...], preferred_element_type=jnp.float32) + b2_ref[...]
    ).astype(cdt)

    # fused heads -> single lane-dense store
    out_ref[...] = (
        jnp.dot(h, wh_ref[...], preferred_element_type=jnp.float32) + bh_ref[...]
    ).astype(out_ref.dtype)


# ----------------------------------------------------------------------------- packing
def _pack_params(params, compute_dtype):
    """Fuse/pad the per-layer weights once, outside the kernel (zero padding)."""
    aw1 = params["actor_w1"]
    obs_dim, H = aw1.shape
    A = params["mean_w"].shape[1]
    H2 = 2 * H
    OUTW = max(_LANE, _round_up(2 * A + 1, _LANE))

    # layer 1: [obs_dim, 2H] = [actor | critic]
    w1 = jnp.concatenate([aw1, params["critic_w1"]], axis=1)
    b1 = jnp.concatenate([params["actor_b1"], params["critic_b1"]], axis=1)

    # layer 2: block diagonal [2H, 2H]
    w2 = jnp.zeros((H2, H2), jnp.float32)
    w2 = w2.at[:H, :H].set(params["actor_w2"])
    w2 = w2.at[H:, H:].set(params["critic_w2"])
    b2 = jnp.concatenate([params["actor_b2"], params["critic_b2"]], axis=1)

    # heads: rows [:H] come from ha (mean, log_std), rows [H:] from hc (value)
    wh = jnp.zeros((H2, OUTW), jnp.float32)
    wh = wh.at[:H, 0:A].set(params["mean_w"])
    wh = wh.at[:H, A:2 * A].set(params["log_std_w"])
    wh = wh.at[H:, 2 * A:2 * A + 1].set(params["critic_lin_w"])
    bh = jnp.zeros((1, OUTW), jnp.float32)
    bh = bh.at[:, 0:A].set(params["mean_b"])
    bh = bh.at[:, A:2 * A].set(params["log_std_b"])
    bh = bh.at[:, 2 * A:2 * A + 1].set(params["critic_lin_b"])

    packed = (w1.astype(compute_dtype), b1.astype(jnp.float32),
              w2.astype(compute_dtype), b2.astype(jnp.float32),
              wh.astype(compute_dtype), bh.astype(jnp.float32))
    return packed, (H, A, OUTW)


# ----------------------------------------------------------------------------- wrapper
@functools.partial(jax.jit, static_argnames=("compute_dtype",))
def actor_critic_forward(x, params, done=None, *, compute_dtype=jnp.float32):
    """Pallas forward pass.  Returns (value [B,1], mean [B,A], log_std [B,A])."""
    del done  # unused by the reference module's forward()
    B, obs_dim = x.shape
    (w1, b1, w2, b2, wh, bh), (H, A, OUTW) = _pack_params(params, compute_dtype)
    H2 = 2 * H

    # Batch tile: big enough to hide DMA, small enough for v7x's 64 MiB VMEM.
    TB = 512 if B >= 512 else _round_up(max(B, 1), _SUBLANE)
    B_pad = _round_up(B, TB)
    xp = x.astype(compute_dtype)
    if B_pad != B:
        xp = jnp.pad(xp, ((0, B_pad - B), (0, 0)))

    w_bytes = int((w1.size + w2.size + wh.size) * jnp.dtype(compute_dtype).itemsize)
    cost = pl.CostEstimate(
        flops=2 * B_pad * (obs_dim * H2 + H2 * H2 + H2 * OUTW),
        transcendentals=2 * B_pad * H2,
        bytes_accessed=int(B_pad * obs_dim * xp.dtype.itemsize
                           + B_pad * OUTW * 4 + w_bytes),
    )

    out = pl.pallas_call(
        _actor_critic_fused_kernel,
        out_shape=jax.ShapeDtypeStruct((B_pad, OUTW), jnp.float32),
        grid=(B_pad // TB,),
        in_specs=[
            pl.BlockSpec((TB, obs_dim), lambda i: (i, 0)),   # x: tiled over batch
            pl.BlockSpec((obs_dim, H2), lambda i: (0, 0)),   # weights stay resident
            pl.BlockSpec((1, H2), lambda i: (0, 0)),
            pl.BlockSpec((H2, H2), lambda i: (0, 0)),
            pl.BlockSpec((1, H2), lambda i: (0, 0)),
            pl.BlockSpec((H2, OUTW), lambda i: (0, 0)),
            pl.BlockSpec((1, OUTW), lambda i: (0, 0)),
        ],
        out_specs=pl.BlockSpec((TB, OUTW), lambda i: (i, 0)),
        compiler_params=pltpu.CompilerParams(
            dimension_semantics=("parallel",)),              # megacore on v7x
        cost_estimate=cost,
    )(xp, w1, b1, w2, b2, wh, bh)

    # Slice the lane-dense slab back into the module's three outputs.
    mean = out[:B, 0:A]
    log_std = out[:B, A:2 * A]
    value = out[:B, 2 * A:2 * A + 1]
    return value, mean, log_std


def default_compute_dtype():
    """bf16 MXU operands on bf16-friendly chips (v6e/v7x/...), f32 on v5-class."""
    kind = jax.devices()[0].device_kind.lower()
    return jnp.float32 if "v5" in kind else jnp.bfloat16


# ----------------------------------------------------------------------------- reference / init
def init_params(key, obs_dim, act_dim, hidden=64):
    """Deterministic PyTorch-style init: U(-1/sqrt(fan_in), 1/sqrt(fan_in)).

    Weights are stored already transposed to [in, out]; biases as [1, out].
    """
    def linear(k, fan_in, fan_out):
        kw, kb = jax.random.split(k)
        bound = 1.0 / jnp.sqrt(fan_in)
        w = jax.random.uniform(kw, (fan_in, fan_out), jnp.float32, -bound, bound)
        b = jax.random.uniform(kb, (1, fan_out), jnp.float32, -bound, bound)
        return w, b

    ks = jax.random.split(key, 7)
    p = {}
    p["actor_w1"], p["actor_b1"] = linear(ks[0], obs_dim, hidden)
    p["actor_w2"], p["actor_b2"] = linear(ks[1], hidden, hidden)
    p["critic_w1"], p["critic_b1"] = linear(ks[2], obs_dim, hidden)
    p["critic_w2"], p["critic_b2"] = linear(ks[3], hidden, hidden)
    p["mean_w"], p["mean_b"] = linear(ks[4], hidden, act_dim)
    p["log_std_w"], p["log_std_b"] = linear(ks[5], hidden, act_dim)
    p["critic_lin_w"], p["critic_lin_b"] = linear(ks[6], hidden, 1)
    return p


def reference_forward(x, params):
    """Pure-JAX reference matching the PyTorch module semantics."""
    def mlp(x, w1, b1, w2, b2):
        h = jnp.tanh(x @ w1 + b1)
        return jnp.tanh(h @ w2 + b2)

    ha = mlp(x, params["actor_w1"], params["actor_b1"],
             params["actor_w2"], params["actor_b2"])
    hc = mlp(x, params["critic_w1"], params["critic_b1"],
             params["critic_w2"], params["critic_b2"])
    value = hc @ params["critic_lin_w"] + params["critic_lin_b"]
    mean = ha @ params["mean_w"] + params["mean_b"]
    log_std = ha @ params["log_std_w"] + params["log_std_b"]
    return value, mean, log_std


if __name__ == "__main__":
    OBS_DIM, ACT_DIM, HIDDEN, BATCH = 8, 4, 64, 2

    key = jax.random.PRNGKey(0)
    k_x, k_p = jax.random.split(key)
    x = jax.random.normal(k_x, (BATCH, OBS_DIM), jnp.float32)
    done = jnp.zeros((BATCH,), jnp.float32)  # unused, present for API parity
    params = init_params(k_p, OBS_DIM, ACT_DIM, HIDDEN)

    v_ref, m_ref, ls_ref = reference_forward(x, params)

    # 1) f32 path: exact semantics, tight tolerance (always correct on every chip).
    value, mean, log_std = actor_critic_forward(x, params, done,
                                                compute_dtype=jnp.float32)
    jax.block_until_ready((value, mean, log_std))
    assert value.shape == (BATCH, 1)
    assert mean.shape == (BATCH, ACT_DIM)
    assert log_std.shape == (BATCH, ACT_DIM)
    assert jnp.allclose(value, v_ref, atol=1e-5)
    assert jnp.allclose(mean, m_ref, atol=1e-5)
    assert jnp.allclose(log_std, ls_ref, atol=1e-5)

    # 2) generation-tuned path: bf16 MXU operands on v6e/v7x (f32 accumulate, f32
    #    bias/tanh), skipped on v5-class chips whose VPU/EUP lack bf16.
    cdt = default_compute_dtype()
    if cdt != jnp.float32:
        v2, m2, l2 = actor_critic_forward(x, params, done, compute_dtype=cdt)
        jax.block_until_ready((v2, m2, l2))
        assert jnp.allclose(v2, v_ref, atol=5e-2, rtol=5e-2)
        assert jnp.allclose(m2, m_ref, atol=5e-2, rtol=5e-2)
        assert jnp.allclose(l2, ls_ref, atol=5e-2, rtol=5e-2)

    print("KERNEL_OK")
</pallas_src>

<mosaic_0001>
module attributes {stable_mosaic.version = 11 : i64} {
  func.func @_actor_critic_fused_kernel(%arg0: i32, %arg1: memref<8x8xf32, #tpu.memory_space<vmem>>, %arg2: memref<8x128xf32, #tpu.memory_space<vmem>>, %arg3: memref<1x128xf32, #tpu.memory_space<vmem>>, %arg4: memref<128x128xf32, #tpu.memory_space<vmem>>, %arg5: memref<1x128xf32, #tpu.memory_space<vmem>>, %arg6: memref<128x128xf32, #tpu.memory_space<vmem>>, %arg7: memref<1x128xf32, #tpu.memory_space<vmem>>, %arg8: memref<8x128xf32, #tpu.memory_space<vmem>>) attributes {dimension_semantics = [#tpu.dimension_semantics<parallel>], iteration_bounds = array<i64: 1>, scalar_prefetch = 0 : i64, scratch_operands = 0 : i64, tpu.core_type = #tpu.core_type<tc>, window_params = [{transform_indices = @transform_0, window_bounds = array<i64: 8, 8>}, {pipeline_mode = #tpu.pipeline_mode<synchronous>, transform_indices = @transform_1, window_bounds = array<i64: 8, 128>}, {pipeline_mode = #tpu.pipeline_mode<synchronous>, transform_indices = @transform_2, window_bounds = array<i64: 1, 128>}, {pipeline_mode = #tpu.pipeline_mode<synchronous>, transform_indices = @transform_3, window_bounds = array<i64: 128, 128>}, {pipeline_mode = #tpu.pipeline_mode<synchronous>, transform_indices = @transform_4, window_bounds = array<i64: 1, 128>}, {pipeline_mode = #tpu.pipeline_mode<synchronous>, transform_indices = @transform_5, window_bounds = array<i64: 128, 128>}, {pipeline_mode = #tpu.pipeline_mode<synchronous>, transform_indices = @transform_6, window_bounds = array<i64: 1, 128>}, {transform_indices = @transform_7, window_bounds = array<i64: 8, 128>}]} {
    %c0 = arith.constant 0 : index
    %c0_0 = arith.constant 0 : index
    %0 = vector.load %arg1[%c0, %c0_0] : memref<8x8xf32, #tpu.memory_space<vmem>>, vector<8x8xf32>
    %c0_1 = arith.constant 0 : index
    %c0_2 = arith.constant 0 : index
    %1 = vector.load %arg2[%c0_1, %c0_2] : memref<8x128xf32, #tpu.memory_space<vmem>>, vector<8x128xf32>
    %cst = arith.constant dense<0.000000e+00> : vector<8x128xf32>
    %2 = tpu.matmul %0, %1, %cst {dimension_numbers = #tpu.dot_dimension_numbers<[1], [0], [0], [1], [0, 0, 1, 1], [], []>} : vector<8x8xf32>, vector<8x128xf32>, vector<8x128xf32> -> vector<8x128xf32>
    %c0_3 = arith.constant 0 : index
    %c0_4 = arith.constant 0 : index
    %3 = vector.load %arg3[%c0_3, %c0_4] : memref<1x128xf32, #tpu.memory_space<vmem>>, vector<1x128xf32>
    %4 = vector.broadcast %3 : vector<1x128xf32> to vector<8x128xf32>
    %5 = arith.addf %2, %4 : vector<8x128xf32>
    %6 = math.tanh %5 : vector<8x128xf32>
    %c0_5 = arith.constant 0 : index
    %c0_6 = arith.constant 0 : index
    %7 = vector.load %arg4[%c0_5, %c0_6] : memref<128x128xf32, #tpu.memory_space<vmem>>, vector<128x128xf32>
    %cst_7 = arith.constant dense<0.000000e+00> : vector<8x128xf32>
    %8 = tpu.matmul %6, %7, %cst_7 {dimension_numbers = #tpu.dot_dimension_numbers<[1], [0], [0], [1], [0, 0, 1, 1], [], []>} : vector<8x128xf32>, vector<128x128xf32>, vector<8x128xf32> -> vector<8x128xf32>
    %c0_8 = arith.constant 0 : index
    %c0_9 = arith.constant 0 : index
    %9 = vector.load %arg5[%c0_8, %c0_9] : memref<1x128xf32, #tpu.memory_space<vmem>>, vector<1x128xf32>
    %10 = vector.broadcast %9 : vector<1x128xf32> to vector<8x128xf32>
    %11 = arith.addf %8, %10 : vector<8x128xf32>
    %12 = math.tanh %11 : vector<8x128xf32>
    %c0_10 = arith.constant 0 : index
    %c0_11 = arith.constant 0 : index
    %13 = vector.load %arg6[%c0_10, %c0_11] : memref<128x128xf32, #tpu.memory_space<vmem>>, vector<128x128xf32>
    %cst_12 = arith.constant dense<0.000000e+00> : vector<8x128xf32>
    %14 = tpu.matmul %12, %13, %cst_12 {dimension_numbers = #tpu.dot_dimension_numbers<[1], [0], [0], [1], [0, 0, 1, 1], [], []>} : vector<8x128xf32>, vector<128x128xf32>, vector<8x128xf32> -> vector<8x128xf32>
    %c0_13 = arith.constant 0 : index
    %c0_14 = arith.constant 0 : index
    %15 = vector.load %arg7[%c0_13, %c0_14] : memref<1x128xf32, #tpu.memory_space<vmem>>, vector<1x128xf32>
    %16 = vector.broadcast %15 : vector<1x128xf32> to vector<8x128xf32>
    %17 = arith.addf %14, %16 : vector<8x128xf32>
    %c0_15 = arith.constant 0 : index
    %c0_16 = arith.constant 0 : index
    %18 = vector.load %arg8[%c0_15, %c0_16] : memref<8x128xf32, #tpu.memory_space<vmem>>, vector<8x128xf32>
    tpu.vector_store %arg8[%c0_15, %c0_16], %17 {strides = array<i32>} : memref<8x128xf32, #tpu.memory_space<vmem>>, vector<8x128xf32>,
    return
  }
  func.func @transform_0(%arg0: i32) -> (i32, i32) {
    %c0_i32 = arith.constant 0 : i32
    %c0_i32_0 = arith.constant 0 : i32
    return %arg0, %c0_i32 : i32, i32
  }
  func.func @transform_1(%arg0: i32) -> (i32, i32) {
    %c0_i32 = arith.constant 0 : i32
    %c0_i32_0 = arith.constant 0 : i32
    %c0_i32_1 = arith.constant 0 : i32
    return %c0_i32, %c0_i32_0 : i32, i32
  }
  func.func @transform_2(%arg0: i32) -> (i32, i32) {
    %c0_i32 = arith.constant 0 : i32
    %c0_i32_0 = arith.constant 0 : i32
    %c0_i32_1 = arith.constant 0 : i32
    return %c0_i32, %c0_i32_0 : i32, i32
  }
  func.func @transform_3(%arg0: i32) -> (i32, i32) {
    %c0_i32 = arith.constant 0 : i32
    %c0_i32_0 = arith.constant 0 : i32
    %c0_i32_1 = arith.constant 0 : i32
    return %c0_i32, %c0_i32_0 : i32, i32
  }
  func.func @transform_4(%arg0: i32) -> (i32, i32) {
    %c0_i32 = arith.constant 0 : i32
    %c0_i32_0 = arith.constant 0 : i32
    %c0_i32_1 = arith.constant 0 : i32
    return %c0_i32, %c0_i32_0 : i32, i32
  }
  func.func @transform_5(%arg0: i32) -> (i32, i32) {
    %c0_i32 = arith.constant 0 : i32
    %c0_i32_0 = arith.constant 0 : i32
    %c0_i32_1 = arith.constant 0 : i32
    return %c0_i32, %c0_i32_0 : i32, i32
  }
  func.func @transform_6(%arg0: i32) -> (i32, i32) {
    %c0_i32 = arith.constant 0 : i32
    %c0_i32_0 = arith.constant 0 : i32
    %c0_i32_1 = arith.constant 0 : i32
    return %c0_i32, %c0_i32_0 : i32, i32
  }
  func.func @transform_7(%arg0: i32) -> (i32, i32) {
    %c0_i32 = arith.constant 0 : i32
    %c0_i32_0 = arith.constant 0 : i32
    return %arg0, %c0_i32 : i32, i32
  }
}

</mosaic_0001>

<llo_original>
// kernel: actor_critic_forward.1
$region0: #{actor_critic_forward.1}
  #allocation0 [shape = 'u32[]', space=smem, size = 0x4, offset = 0x4, fixed_abs, tag = 'smem constant byte address 0x4 - core index']
  #allocation1 [shape = 'u32[144,128]{1,0:T(1,128)}', space=vmem, size = 0x12000, scoped, tag = 'internal scratch']
  %s0 = inlined_call_operand.vmem [shape: f32[8,8], index: 0, kind: input, shape index: {}]
  %s1 = inlined_call_operand.vmem [shape: f32[8,128], index: 1, kind: input, shape index: {}]
  %s2 = inlined_call_operand.vmem [shape: f32[1,128], index: 2, kind: input, shape index: {}]
  %s3 = inlined_call_operand.vmem [shape: f32[128,128], index: 3, kind: input, shape index: {}]
  %s4 = inlined_call_operand.vmem [shape: f32[1,128], index: 4, kind: input, shape index: {}]
  %s5 = inlined_call_operand.vmem [shape: f32[128,128], index: 5, kind: input, shape index: {}]
  %s6 = inlined_call_operand.vmem [shape: f32[1,128], index: 6, kind: input, shape index: {}]
  %s7 = inlined_call_operand.vmem [shape: f32[8,128], index: 7, kind: output, shape index: {}]
  %s8 = sld [smem:[#allocation0]]
  $region38: #{actor_critic_forward.1} parent=0
    _
  %s10 = ssub.s32 1, %s8
  %s11 = scalar_select 0, %s10, %s8
  // Predicated region
  $region2: #{actor_critic_forward.1} parent=0 // pred_check
    _
  $region3: #{actor_critic_forward.1} parent=0 // pred_check_branch
    %13 = sbr.rel (0) target = $region5
  $region4: #{actor_critic_forward.1} parent=0 // pred_region
    _
  $region5: #{actor_critic_forward.1} parent=0 // pred_fallthru
    _
  // Predicated region
  $region6: #{actor_critic_forward.1} parent=0 // pred_check
    _
  $region7: #{actor_critic_forward.1} parent=0 // pred_check_branch
    %15 = sbr.rel (0) target = $region9
  $region8: #{actor_critic_forward.1} parent=0 // pred_region
    _
  $region9: #{actor_critic_forward.1} parent=0 // pred_fallthru
    _
  // Predicated region
  $region10: #{actor_critic_forward.1} parent=0 // pred_check
    _
  $region11: #{actor_critic_forward.1} parent=0 // pred_check_branch
    %17 = sbr.rel (0) target = $region13
  $region12: #{actor_critic_forward.1} parent=0 // pred_region
    _
  $region13: #{actor_critic_forward.1} parent=0 // pred_fallthru
    _
  // Predicated region
  $region14: #{actor_critic_forward.1} parent=0 // pred_check
    _
  $region15: #{actor_critic_forward.1} parent=0 // pred_check_branch
    %19 = sbr.rel (0) target = $region17
  $region16: #{actor_critic_forward.1} parent=0 // pred_region
    _
  $region17: #{actor_critic_forward.1} parent=0 // pred_fallthru
    _
  // Predicated region
  $region18: #{actor_critic_forward.1} parent=0 // pred_check
    _
  $region19: #{actor_critic_forward.1} parent=0 // pred_check_branch
    %21 = sbr.rel (0) target = $region21
  $region20: #{actor_critic_forward.1} parent=0 // pred_region
    _
  $region21: #{actor_critic_forward.1} parent=0 // pred_fallthru
    _
  // Predicated region
  $region22: #{actor_critic_forward.1} parent=0 // pred_check
    _
  $region23: #{actor_critic_forward.1} parent=0 // pred_check_branch
    %23 = sbr.rel (0) target = $region25
  $region24: #{actor_critic_forward.1} parent=0 // pred_region
    _
  $region25: #{actor_critic_forward.1} parent=0 // pred_fallthru
    _
  // Predicated region
  $region26: #{actor_critic_forward.1} parent=0 // pred_check
    _
  $region27: #{actor_critic_forward.1} parent=0 // pred_check_branch
    %25 = sbr.rel (0) target = $region29
  $region28: #{actor_critic_forward.1} parent=0 // pred_region
    _
  $region29: #{actor_critic_forward.1} parent=0 // pred_fallthru
    _
  %v26 = vld [vmem:[%s0] sm:$0xff]
  %v27 = vld [vmem:[%s1] sm:$0xff]
  %v28 = vld [vmem:[%s2] sm:$0x1]
  %v30 = vlaneseq
  %v31 = vshrl.u32 %v30, 7
  %v32 = vsub.s32 0, %v31
  %v33 = vrot.slane %v28, %v32
  %vm35 = vcmask 64512
  %v37 = vsel %vm35, %v26, 0
  %39 = vmatprep.subr.mxu0 0.0
  %40 = vmatpush1.msra.mxu0 %v27
  %41 = vmatprep.subr.mxu0 0.0
  %42 = vmatpush1.msra.mxu0 0.0
  %43 = vmatprep.subr.mxu0 0.0
  %44 = vmatpush1.msra.mxu0 0.0
  %45 = vmatprep.subr.mxu0 0.0
  %46 = vmatpush1.msra.mxu0 0.0
  %47 = vmatprep.subr.mxu0 0.0
  %48 = vmatpush1.msra.mxu0 0.0
  %49 = vmatprep.subr.mxu0 0.0
  %50 = vmatpush1.msra.mxu0 0.0
  %51 = vmatprep.subr.mxu0 0.0
  %52 = vmatpush1.msra.mxu0 0.0
  %53 = vmatprep.subr.mxu0 0.0
  %54 = vmatpush1.msra.mxu0 0.0
  %55 = vmatprep.subr.mxu0 0.0
  %56 = vmatpush1.msra.mxu0 0.0
  %57 = vmatprep.subr.mxu0 0.0
  %58 = vmatpush1.msra.mxu0 0.0
  %59 = vmatprep.subr.mxu0 0.0
  %60 = vmatpush1.msra.mxu0 0.0
  %61 = vmatprep.subr.mxu0 0.0
  %62 = vmatpush1.msra.mxu0 0.0
  %63 = vmatprep.subr.mxu0 0.0
  %64 = vmatpush1.msra.mxu0 0.0
  %65 = vmatprep.subr.mxu0 0.0
  %66 = vmatpush1.msra.mxu0 0.0
  %67 = vmatprep.subr.mxu0 0.0
  %68 = vmatpush1.msra.mxu0 0.0
  %69 = vmatprep.subr.mxu0 0.0
  %70 = vmatpush1.msra.mxu0 0.0
  %71 = vmatprep.subr.mxu0 0.0
  %72 = vmatpush1.msra.mxu0 0.0
  %73 = vmatprep.subr.mxu0 0.0
  %74 = vmatpush1.msra.mxu0 0.0
  %75 = vmatprep.subr.mxu0 0.0
  %76 = vmatpush1.msra.mxu0 0.0
  %77 = vmatprep.subr.mxu0 0.0
  %78 = vmatpush1.msra.mxu0 0.0
  %79 = vmatprep.subr.mxu0 0.0
  %80 = vmatpush1.msra.mxu0 0.0
  %81 = vmatprep.subr.mxu0 0.0
  %82 = vmatpush1.msra.mxu0 0.0
  %83 = vmatprep.subr.mxu0 0.0
  %84 = vmatpush1.msra.mxu0 0.0
  %85 = vmatprep.subr.mxu0 0.0
  %86 = vmatpush1.msra.mxu0 0.0
  %87 = vmatprep.subr.mxu0 0.0
  %88 = vmatpush1.msra.mxu0 0.0
  %89 = vmatprep.subr.mxu0 0.0
  %90 = vmatpush1.msra.mxu0 0.0
  %91 = vmatprep.subr.mxu0 0.0
  %92 = vmatpush1.msra.mxu0 0.0
  %93 = vmatprep.subr.mxu0 0.0
  %94 = vmatpush1.msra.mxu0 0.0
  %95 = vmatprep.subr.mxu0 0.0
  %96 = vmatpush1.msra.mxu0 0.0
  %97 = vmatprep.subr.mxu0 0.0
  %98 = vmatpush1.msra.mxu0 0.0
  %99 = vmatprep.subr.mxu0 0.0
  %100 = vmatpush1.msra.mxu0 0.0
  %101 = vmatprep.subr.mxu0 0.0
  %102 = vmatpush1.msra.mxu0 0.0
  %103 = vmatprep.mubr.f32.mxu0 0.0
  %104 = vmatmul.mubr.f32.gmra.mrb[0].mxu0 %v37
  %v105 = vpop.f32.mrb[0].mxu0
  %v106 = vadd.f32 %v33, %v105
  %v107 = vpop.f32.mrb[0].mxu0
  %108 = vdwg.mxu0
  %v109 = vtanh.pop %v106
  %v110 = vld [vmem:[%s3] sm:$0xff]
  %v111 = vld [vmem:[%s3 + $0x8] sm:$0xff]
  %v112 = vld [vmem:[%s3 + $0x10] sm:$0xff]
  %v113 = vld [vmem:[%s3 + $0x18] sm:$0xff]
  %v114 = vld [vmem:[%s3 + $0x20] sm:$0xff]
  %v115 = vld [vmem:[%s3 + $0x28] sm:$0xff]
  %v116 = vld [vmem:[%s3 + $0x30] sm:$0xff]
  %v117 = vld [vmem:[%s3 + $0x38] sm:$0xff]
  %v118 = vld [vmem:[%s3 + $0x40] sm:$0xff]
  %v119 = vld [vmem:[%s3 + $0x48] sm:$0xff]
  %v120 = vld [vmem:[%s3 + $0x50] sm:$0xff]
  %v121 = vld [vmem:[%s3 + $0x58] sm:$0xff]
  %v122 = vld [vmem:[%s3 + $0x60] sm:$0xff]
  %v123 = vld [vmem:[%s3 + $0x68] sm:$0xff]
  %v124 = vld [vmem:[%s3 + $0x70] sm:$0xff]
  %v125 = vld [vmem:[%s3 + $0x78] sm:$0xff]
  %v126 = vld [vmem:[%s4] sm:$0x1]
  %v128 = vlaneseq
  %v129 = vshrl.u32 %v128, 7
  %v130 = vsub.s32 0, %v129
  %v131 = vrot.slane %v126, %v130
  %133 = vmatprep.subr.mxu0 0.0
  %134 = vmatpush1.msra.mxu0 %v110
  %135 = vmatprep.subr.mxu0 0.0
  %136 = vmatpush1.msra.mxu0 %v111
  %137 = vmatprep.subr.mxu0 0.0
  %138 = vmatpush1.msra.mxu0 %v112
  %139 = vmatprep.subr.mxu0 0.0
  %140 = vmatpush1.msra.mxu0 %v113
  %141 = vmatprep.subr.mxu0 0.0
  %142 = vmatpush1.msra.mxu0 %v114
  %143 = vmatprep.subr.mxu0 0.0
  %144 = vmatpush1.msra.mxu0 %v115
  %145 = vmatprep.subr.mxu0 0.0
  %146 = vmatpush1.msra.mxu0 %v116
  %147 = vmatprep.subr.mxu0 0.0
  %148 = vmatpush1.msra.mxu0 %v117
  %149 = vmatprep.subr.mxu0 0.0
  %150 = vmatpush1.msra.mxu0 %v118
  %151 = vmatprep.subr.mxu0 0.0
  %152 = vmatpush1.msra.mxu0 %v119
  %153 = vmatprep.subr.mxu0 0.0
  %154 = vmatpush1.msra.mxu0 %v120
  %155 = vmatprep.subr.mxu0 0.0
  %156 = vmatpush1.msra.mxu0 %v121
  %157 = vmatprep.subr.mxu0 0.0
  %158 = vmatpush1.msra.mxu0 %v122
  %159 = vmatprep.subr.mxu0 0.0
  %160 = vmatpush1.msra.mxu0 %v123
  %161 = vmatprep.subr.mxu0 0.0
  %162 = vmatpush1.msra.mxu0 %v124
  %163 = vmatprep.subr.mxu0 0.0
  %164 = vmatpush1.msra.mxu0 %v125
  %165 = vmatprep.subr.mxu0 0.0
  %166 = vmatpush1.msra.mxu0 0.0
  %167 = vmatprep.subr.mxu0 0.0
  %168 = vmatpush1.msra.mxu0 0.0
  %169 = vmatprep.subr.mxu0 0.0
  %170 = vmatpush1.msra.mxu0 0.0
  %171 = vmatprep.subr.mxu0 0.0
  %172 = vmatpush1.msra.mxu0 0.0
  %173 = vmatprep.subr.mxu0 0.0
  %174 = vmatpush1.msra.mxu0 0.0
  %175 = vmatprep.subr.mxu0 0.0
  %176 = vmatpush1.msra.mxu0 0.0
  %177 = vmatprep.subr.mxu0 0.0
  %178 = vmatpush1.msra.mxu0 0.0
  %179 = vmatprep.subr.mxu0 0.0
  %180 = vmatpush1.msra.mxu0 0.0
  %181 = vmatprep.subr.mxu0 0.0
  %182 = vmatpush1.msra.mxu0 0.0
  %183 = vmatprep.subr.mxu0 0.0
  %184 = vmatpush1.msra.mxu0 0.0
  %185 = vmatprep.subr.mxu0 0.0
  %186 = vmatpush1.msra.mxu0 0.0
  %187 = vmatprep.subr.mxu0 0.0
  %188 = vmatpush1.msra.mxu0 0.0
  %189 = vmatprep.subr.mxu0 0.0
  %190 = vmatpush1.msra.mxu0 0.0
  %191 = vmatprep.subr.mxu0 0.0
  %192 = vmatpush1.msra.mxu0 0.0
  %193 = vmatprep.subr.mxu0 0.0
  %194 = vmatpush1.msra.mxu0 0.0
  %195 = vmatprep.subr.mxu0 0.0
  %196 = vmatpush1.msra.mxu0 0.0
  %197 = vmatprep.mubr.f32.mxu0 0.0
  %198 = vmatmul.mubr.f32.gmra.mrb[0].mxu0 %v109
  %v199 = vpop.f32.mrb[0].mxu0
  %v200 = vadd.f32 %v131, %v199
  %v201 = vpop.f32.mrb[0].mxu0
  %202 = vdwg.mxu0
  %v203 = vtanh.pop %v200
  %v204 = vld [vmem:[%s5] sm:$0xff]
  %v205 = vld [vmem:[%s5 + $0x8] sm:$0xff]
  %v206 = vld [vmem:[%s5 + $0x10] sm:$0xff]
  %v207 = vld [vmem:[%s5 + $0x18] sm:$0xff]
  %v208 = vld [vmem:[%s5 + $0x20] sm:$0xff]
  %v209 = vld [vmem:[%s5 + $0x28] sm:$0xff]
  %v210 = vld [vmem:[%s5 + $0x30] sm:$0xff]
  %v211 = vld [vmem:[%s5 + $0x38] sm:$0xff]
  %v212 = vld [vmem:[%s5 + $0x40] sm:$0xff]
  %v213 = vld [vmem:[%s5 + $0x48] sm:$0xff]
  %v214 = vld [vmem:[%s5 + $0x50] sm:$0xff]
  %v215 = vld [vmem:[%s5 + $0x58] sm:$0xff]
  %v216 = vld [vmem:[%s5 + $0x60] sm:$0xff]
  %v217 = vld [vmem:[%s5 + $0x68] sm:$0xff]
  %v218 = vld [vmem:[%s5 + $0x70] sm:$0xff]
  %v219 = vld [vmem:[%s5 + $0x78] sm:$0xff]
  %v220 = vld [vmem:[%s6] sm:$0x1]
  %v222 = vlaneseq
  %v223 = vshrl.u32 %v222, 7
  %v224 = vsub.s32 0, %v223
  %v225 = vrot.slane %v220, %v224
  %227 = vmatprep.subr.mxu0 0.0
  %228 = vmatpush1.msra.mxu0 %v204
  %229 = vmatprep.subr.mxu0 0.0
  %230 = vmatpush1.msra.mxu0 %v205
  %231 = vmatprep.subr.mxu0 0.0
  %232 = vmatpush1.msra.mxu0 %v206
  %233 = vmatprep.subr.mxu0 0.0
  %234 = vmatpush1.msra.mxu0 %v207
  %235 = vmatprep.subr.mxu0 0.0
  %236 = vmatpush1.msra.mxu0 %v208
  %237 = vmatprep.subr.mxu0 0.0
  %238 = vmatpush1.msra.mxu0 %v209
  %239 = vmatprep.subr.mxu0 0.0
  %240 = vmatpush1.msra.mxu0 %v210
  %241 = vmatprep.subr.mxu0 0.0
  %242 = vmatpush1.msra.mxu0 %v211
  %243 = vmatprep.subr.mxu0 0.0
  %244 = vmatpush1.msra.mxu0 %v212
  %245 = vmatprep.subr.mxu0 0.0
  %246 = vmatpush1.msra.mxu0 %v213
  %247 = vmatprep.subr.mxu0 0.0
  %248 = vmatpush1.msra.mxu0 %v214
  %249 = vmatprep.subr.mxu0 0.0
  %250 = vmatpush1.msra.mxu0 %v215
  %251 = vmatprep.subr.mxu0 0.0
  %252 = vmatpush1.msra.mxu0 %v216
  %253 = vmatprep.subr.mxu0 0.0
  %254 = vmatpush1.msra.mxu0 %v217
  %255 = vmatprep.subr.mxu0 0.0
  %256 = vmatpush1.msra.mxu0 %v218
  %257 = vmatprep.subr.mxu0 0.0
  %258 = vmatpush1.msra.mxu0 %v219
  %259 = vmatprep.subr.mxu0 0.0
  %260 = vmatpush1.msra.mxu0 0.0
  %261 = vmatprep.subr.mxu0 0.0
  %262 = vmatpush1.msra.mxu0 0.0
  %263 = vmatprep.subr.mxu0 0.0
  %264 = vmatpush1.msra.mxu0 0.0
  %265 = vmatprep.subr.mxu0 0.0
  %266 = vmatpush1.msra.mxu0 0.0
  %267 = vmatprep.subr.mxu0 0.0
  %268 = vmatpush1.msra.mxu0 0.0
  %269 = vmatprep.subr.mxu0 0.0
  %270 = vmatpush1.msra.mxu0 0.0
  %271 = vmatprep.subr.mxu0 0.0
  %272 = vmatpush1.msra.mxu0 0.0
  %273 = vmatprep.subr.mxu0 0.0
  %274 = vmatpush1.msra.mxu0 0.0
  %275 = vmatprep.subr.mxu0 0.0
  %276 = vmatpush1.msra.mxu0 0.0
  %277 = vmatprep.subr.mxu0 0.0
  %278 = vmatpush1.msra.mxu0 0.0
  %279 = vmatprep.subr.mxu0 0.0
  %280 = vmatpush1.msra.mxu0 0.0
  %281 = vmatprep.subr.mxu0 0.0
  %282 = vmatpush1.msra.mxu0 0.0
  %283 = vmatprep.subr.mxu0 0.0
  %284 = vmatpush1.msra.mxu0 0.0
  %285 = vmatprep.subr.mxu0 0.0
  %286 = vmatpush1.msra.mxu0 0.0
  %287 = vmatprep.subr.mxu0 0.0
  %288 = vmatpush1.msra.mxu0 0.0
  %289 = vmatprep.subr.mxu0 0.0
  %290 = vmatpush1.msra.mxu0 0.0
  %291 = vmatprep.mubr.f32.mxu0 0.0
  %292 = vmatmul.mubr.f32.gmra.mrb[0].mxu0 %v203
  %v293 = vpop.f32.mrb[0].mxu0
  %v294 = vadd.f32 %v225, %v293
  %v295 = vpop.f32.mrb[0].mxu0
  %296 = vdwg.mxu0
  %297 = vst [vmem:[%s7] sm:$0xff] %v294
  // Predicated region
  $region30: #{actor_critic_forward.1} parent=0 // pred_check
    _
  $region31: #{actor_critic_forward.1} parent=0 // pred_check_branch
    %299 = sbr.rel (0) target = $region33
  $region32: #{actor_critic_forward.1} parent=0 // pred_region
    _
  $region33: #{actor_critic_forward.1} parent=0 // pred_fallthru
    _
  // Predicated region
  $region34: #{actor_critic_forward.1} parent=0 // pred_check
    _
  $region35: #{actor_critic_forward.1} parent=0 // pred_check_branch
    %301 = sbr.rel (0) target = $region37
  $region36: #{actor_critic_forward.1} parent=0 // pred_region
    _
  $region37: #{actor_critic_forward.1} parent=0 // pred_fallthru
    _

</llo_original>
